<compile_context>
chip_gen: v7x
topology: tpu7x:2x2x1
jax: 0.10.0
libtpu: 0.0.40
codegen_flags: <defaults>
</compile_context>

<pallas_src>
import numpy as np
from functools import partial

import jax
import jax.numpy as jnp
from jax.experimental import pallas as pl
from jax.experimental.pallas import tpu as pltpu


# -----------------------------------------------------------------------------
# Pallas kernel: column-wise dot product + sigmoid (edge axis on lanes)
#   in : x_ref (D, TM) bf16, y_ref (D, TM) bf16
#   out: o_ref (1, TM) f32  -> sigmoid(sum(x * y, axis=0))
# -----------------------------------------------------------------------------
def _dot_sigmoid_kernel(x_ref, y_ref, o_ref):
    x = x_ref[...].astype(jnp.float32)
    y = y_ref[...].astype(jnp.float32)
    s = jnp.sum(x * y, axis=0, keepdims=True)            # (1, TM) sublane reduce
    o_ref[...] = jax.nn.sigmoid(s).astype(o_ref.dtype)   # lane-dense store


def dot_sigmoid_lanes(x_t, y_t, *, tm):
    """sigmoid(sum(x_t * y_t, axis=0)) for (D, N_pad) slabs. Returns (N_pad,)."""
    assert x_t.shape == y_t.shape and x_t.ndim == 2
    d, n_pad = x_t.shape
    assert n_pad % tm == 0 and tm % 128 == 0

    out = pl.pallas_call(
        _dot_sigmoid_kernel,
        out_shape=jax.ShapeDtypeStruct((1, n_pad), jnp.float32),
        grid_spec=pltpu.PrefetchScalarGridSpec(
            num_scalar_prefetch=0,
            grid=(n_pad // tm,),
            in_specs=[
                pl.BlockSpec((d, tm), lambda i: (0, i)),
                pl.BlockSpec((d, tm), lambda i: (0, i)),
            ],
            out_specs=pl.BlockSpec((1, tm), lambda i: (0, i)),
        ),
        compiler_params=pltpu.CompilerParams(
            dimension_semantics=("parallel",)),
    )(x_t, y_t)
    return out[0]


def _round_up(x, m):
    return ((x + m - 1) // m) * m


def _choose_tile(n, d):
    """Edge tile TM (multiple of 128) and padded edge count N_pad."""
    # VMEM/step budget: 2 inputs x 2 buffers x D*TM*2B (bf16) <= ~4 MiB.
    cap = 8192 if d <= 64 else 4096
    n128 = max(128, _round_up(n, 128))
    if n128 <= 128:
        tm = 128                                   # single tiny step
    else:
        # At least two grid steps so v7x's two TensorCores both get work;
        # costs nothing on single-TC v5e/v6e.
        tm = min(cap, max(128, ((n128 // 2) // 128) * 128))
    n_pad = _round_up(n128, tm)
    return tm, n_pad


# Single jitted device-side path: both gathers + the Pallas kernel.
# Specializes on (D, n_pad, tm); jit's shape cache avoids retracing per call.
@partial(jax.jit, static_argnames=("tm",))
def _fused_forward(B_t, VW_t, left_idx, right_idx, *, tm):
    x_t = jnp.take(B_t, left_idx, axis=1)     # (D, N_pad) bf16 slab (lane-major)
    y_t = jnp.take(VW_t, right_idx, axis=1)   # (D, N_pad) bf16 slab
    return dot_sigmoid_lanes(x_t, y_t, tm=tm)


# -----------------------------------------------------------------------------
# Model: embedding tables (stored transposed, bf16) + forward
#   (sparse COO extraction is host-side glue; the gather + mul + reduce +
#    sigmoid hot path runs on device under one jit, tiled over edges)
# -----------------------------------------------------------------------------
class Model:
    def __init__(self, userNum, itemNum, hide_dim, key):
        kB, kV, kW = jax.random.split(key, 3)
        # xavier_normal_: std = sqrt(2 / (fan_in + fan_out))
        std_u = float(np.sqrt(2.0 / (userNum + hide_dim)))
        std_i = float(np.sqrt(2.0 / (itemNum + hide_dim)))
        B = jax.random.normal(kB, (userNum, hide_dim), jnp.float32) * std_u
        V = jax.random.normal(kV, (itemNum, hide_dim), jnp.float32) * std_i
        W = jax.random.normal(kW, (userNum, hide_dim), jnp.float32) * std_u
        # Transposed bf16 storage: (D, rows); V and W stacked so one gather
        # serves both the rating and the trust problems.
        self.B_t = jnp.asarray(B.T, dtype=jnp.bfloat16)               # (D, userNum)
        self.VW_t = jnp.concatenate(
            [jnp.asarray(V.T, jnp.bfloat16), jnp.asarray(W.T, jnp.bfloat16)],
            axis=1)                                                    # (D, itemNum+userNum)
        self.userNum = userNum
        self.itemNum = itemNum
        self.hide_dim = hide_dim

    # Row-major f32 views (for reference checks / parity with the PyTorch module).
    @property
    def B(self):
        return self.B_t.astype(jnp.float32).T

    @property
    def V(self):
        return self.VW_t[:, :self.itemNum].astype(jnp.float32).T

    @property
    def W(self):
        return self.VW_t[:, self.itemNum:].astype(jnp.float32).T

    def forward(self, trainMat, trustMat, uid):
        # --- host glue: emulate scipy-sparse COO extraction (trainMat[uid].tocoo()) ---
        trainMat = np.asarray(trainMat)
        trustMat = np.asarray(trustMat)
        uid = np.asarray(uid)

        r_row, r_col = np.nonzero(trainMat[uid])   # rating edges
        user_idx = uid[r_row]
        item_idx = r_col

        t_row, t_col = np.nonzero(trustMat[uid])   # trust edges
        user_idx2 = uid[t_row]
        trust_idx2 = t_col

        n_r = int(user_idx.shape[0])
        n_t = int(user_idx2.shape[0])
        n = n_r + n_t
        if n == 0:
            z = jnp.zeros((0,), jnp.float32)
            return z, z

        # Fuse both problems: left operand always from B, right from [V ; W].
        left_idx = np.concatenate([user_idx, user_idx2]).astype(np.int32)
        right_idx = np.concatenate(
            [item_idx, self.itemNum + trust_idx2]).astype(np.int32)

        tm, n_pad = _choose_tile(n, self.hide_dim)
        if n_pad != n:
            pad = n_pad - n
            left_idx = np.pad(left_idx, (0, pad))    # index 0 -> valid row, discarded later
            right_idx = np.pad(right_idx, (0, pad))

        # --- device hot path: gathers + Pallas kernel under one jit ---
        pred = _fused_forward(self.B_t, self.VW_t,
                              jnp.asarray(left_idx), jnp.asarray(right_idx),
                              tm=tm)
        pred_r = pred[:n_r]
        pred_t = pred[n_r:n]
        return pred_r, pred_t


if __name__ == "__main__":
    key = jax.random.PRNGKey(0)
    k_model, k_train, k_trust = jax.random.split(key, 3)

    userNum, itemNum, hide_dim = 16, 24, 32
    model = Model(userNum, itemNum, hide_dim, k_model)

    # Deterministic synthetic sparse interaction / trust matrices (0/1).
    trainMat = (jax.random.uniform(k_train, (userNum, itemNum)) < 0.25).astype(jnp.int32)
    trustMat = (jax.random.uniform(k_trust, (userNum, userNum)) < 0.25).astype(jnp.int32)
    uid = np.array([0, 2, 3, 5, 7, 9, 11, 13], dtype=np.int64)

    pred_r, pred_t = model.forward(np.asarray(trainMat), np.asarray(trustMat), uid)
    jax.block_until_ready((pred_r, pred_t))

    # Cross-check against plain NumPy reference (f32 math on the bf16-rounded tables).
    trainMat_np = np.asarray(trainMat)
    trustMat_np = np.asarray(trustMat)
    r_row, r_col = np.nonzero(trainMat_np[uid])
    t_row, t_col = np.nonzero(trustMat_np[uid])
    B_np = np.asarray(model.B, dtype=np.float32)
    V_np = np.asarray(model.V, dtype=np.float32)
    W_np = np.asarray(model.W, dtype=np.float32)
    b_ref = B_np[uid[r_row]]
    v_ref = V_np[r_col]
    b2_ref = B_np[uid[t_row]]
    w_ref = W_np[t_col]
    ref_r = 1.0 / (1.0 + np.exp(-np.sum(b_ref * v_ref, axis=1)))
    ref_t = 1.0 / (1.0 + np.exp(-np.sum(b2_ref * w_ref, axis=1)))
    np.testing.assert_allclose(np.asarray(pred_r), ref_r, rtol=1e-5, atol=1e-5)
    np.testing.assert_allclose(np.asarray(pred_t), ref_t, rtol=1e-5, atol=1e-5)

    print("KERNEL_OK")
</pallas_src>

<mosaic_0001>
module attributes {stable_mosaic.version = 11 : i64} {
  func.func @_dot_sigmoid_kernel(%arg0: i32, %arg1: memref<32x128xbf16, #tpu.memory_space<vmem>>, %arg2: memref<32x128xbf16, #tpu.memory_space<vmem>>, %arg3: memref<1x128xf32, #tpu.memory_space<vmem>>) attributes {dimension_semantics = [#tpu.dimension_semantics<parallel>], iteration_bounds = array<i64: 1>, scalar_prefetch = 0 : i64, scratch_operands = 0 : i64, tpu.core_type = #tpu.core_type<tc>, window_params = [{transform_indices = @transform_0, window_bounds = array<i64: 32, 128>}, {transform_indices = @transform_1, window_bounds = array<i64: 32, 128>}, {transform_indices = @transform_2, window_bounds = array<i64: 1, 128>}]} {
    %c0 = arith.constant 0 : index
    %c0_0 = arith.constant 0 : index
    %0 = vector.load %arg1[%c0, %c0_0] : memref<32x128xbf16, #tpu.memory_space<vmem>>, vector<32x128xbf16>
    %1 = arith.extf %0 : vector<32x128xbf16> to vector<32x128xf32>
    %c0_1 = arith.constant 0 : index
    %c0_2 = arith.constant 0 : index
    %2 = vector.load %arg2[%c0_1, %c0_2] : memref<32x128xbf16, #tpu.memory_space<vmem>>, vector<32x128xbf16>
    %3 = arith.extf %2 : vector<32x128xbf16> to vector<32x128xf32>
    %4 = arith.mulf %1, %3 : vector<32x128xf32>
    %cst = arith.constant dense<0.000000e+00> : vector<128xf32>
    %5 = vector.multi_reduction <add>, %4, %cst [0] : vector<32x128xf32> to vector<128xf32>
    %6 = vector.shape_cast %5 : vector<128xf32> to vector<1x128xf32>
    %7 = arith.negf %6 : vector<1x128xf32>
    %8 = math.exp %7 : vector<1x128xf32>
    %cst_3 = arith.constant 1.000000e+00 : f32
    %9 = vector.broadcast %cst_3 : f32 to vector<1x128xf32>
    %10 = arith.addf %9, %8 : vector<1x128xf32>
    %11 = arith.divf %9, %10 : vector<1x128xf32>
    %c0_4 = arith.constant 0 : index
    %c0_5 = arith.constant 0 : index
    %12 = vector.load %arg3[%c0_4, %c0_5] : memref<1x128xf32, #tpu.memory_space<vmem>>, vector<1x128xf32>
    tpu.vector_store %arg3[%c0_4, %c0_5], %11 {strides = array<i32>} : memref<1x128xf32, #tpu.memory_space<vmem>>, vector<1x128xf32>,
    return
  }
  func.func @transform_0(%arg0: i32) -> (i32, i32) {
    %c0_i32 = arith.constant 0 : i32
    %c0_i32_0 = arith.constant 0 : i32
    return %c0_i32, %arg0 : i32, i32
  }
  func.func @transform_1(%arg0: i32) -> (i32, i32) {
    %c0_i32 = arith.constant 0 : i32
    %c0_i32_0 = arith.constant 0 : i32
    return %c0_i32, %arg0 : i32, i32
  }
  func.func @transform_2(%arg0: i32) -> (i32, i32) {
    %c0_i32 = arith.constant 0 : i32
    %c0_i32_0 = arith.constant 0 : i32
    return %c0_i32, %arg0 : i32, i32
  }
}

</mosaic_0001>

<llo_original>
// kernel: _fused_forward.1
$region0: #{_fused_forward.1}
  #allocation0 [shape = 'u32[]', space=smem, size = 0x4, offset = 0x4, fixed_abs, tag = 'smem constant byte address 0x4 - core index']
  #allocation1 [shape = 'u32[144,128]{1,0:T(1,128)}', space=vmem, size = 0x12000, scoped, tag = 'internal scratch']
  %s0 = inlined_call_operand.vmem [shape: bf16[32,128], index: 0, kind: input, shape index: {}]
  %s1 = inlined_call_operand.vmem [shape: bf16[32,128], index: 1, kind: input, shape index: {}]
  %s2 = inlined_call_operand.hbm [shape: f32[1,128], index: 2, kind: output, shape index: {}]
  %s3 = sld [smem:[#allocation0]]
  $region18: #{_fused_forward.1} parent=0
    _
  %s5 = ssub.s32 1, %s3
  %s6 = scalar_select 0, %s5, %s3
  $region1: #{_fused_forward.1} parent=0
    #allocation2 [shape = 'u8[512]{0}', space=vmem, size = 0x400, scoped, tag = 'output window, operand 0, single buffered']
    #allocation3 [shape = 's32[1]{0}', space=sflag, size = 0x4, scoped, tag = 'scoped memory for _fused_forward.1']
    %7 = vsyncpa [#allocation3], 0
    // Predicated region
    $region2: #{_fused_forward.1} parent=1 // pred_check
      _
    $region3: #{_fused_forward.1} parent=1 // pred_check_branch
      %9 = sbr.rel (0) target = $region5
    $region4: #{_fused_forward.1} parent=1 // pred_region
      _
    $region5: #{_fused_forward.1} parent=1 // pred_fallthru
      _
    // Predicated region
    $region6: #{_fused_forward.1} parent=1 // pred_check
      _
    $region7: #{_fused_forward.1} parent=1 // pred_check_branch
      %11 = sbr.rel (0) target = $region9
    $region8: #{_fused_forward.1} parent=1 // pred_region
      _
    $region9: #{_fused_forward.1} parent=1 // pred_fallthru
      _
    %v12 = vld [vmem:[%s0] sm:$0xf]
    %v13 = vld [vmem:[%s0 + $0x4] sm:$0xf]
    %v14 = vld [vmem:[%s0 + $0x8] sm:$0xf]
    %v15 = vld [vmem:[%s0 + $0xc] sm:$0xf]
    %v16 = vunpack.c.l.bf16 %v12
    %v17 = vunpack.c.l.bf16 %v13
    %v18 = vunpack.c.l.bf16 %v14
    %v19 = vunpack.c.l.bf16 %v15
    %v20 = vld [vmem:[%s1] sm:$0xf]
    %v21 = vld [vmem:[%s1 + $0x4] sm:$0xf]
    %v22 = vld [vmem:[%s1 + $0x8] sm:$0xf]
    %v23 = vld [vmem:[%s1 + $0xc] sm:$0xf]
    %v24 = vunpack.c.l.bf16 %v20
    %v25 = vunpack.c.l.bf16 %v21
    %v26 = vunpack.c.l.bf16 %v22
    %v27 = vunpack.c.l.bf16 %v23
    %v28 = vmul.f32 %v16, %v24
    %v29 = vmul.f32 %v17, %v25
    %v30 = vmul.f32 %v18, %v26
    %v31 = vmul.f32 %v19, %v27
    %v32 = vadd.f32 %v28, %v29
    %v33 = vadd.f32 %v32, %v30
    %v34 = vadd.f32 %v33, %v31
    %v35 = vrot.slane %v34, 4
    %v36 = vadd.f32 %v34, %v35
    %v37 = vrot.slane %v36, 2
    %v38 = vadd.f32 %v36, %v37
    %v39 = vrot.slane %v38, 1
    %v40 = vadd.f32 %v38, %v39
    %v41 = vxor.u32 %v40, 2147483648
    %v42 = vmul.f32 %v41, 1.442695
    %v43 = vpow.pop %v42
    %v44 = vadd.f32 %v43, 1.0
    %v45 = vrcp.pop %v44
    %v46 = vmul.f32 1.0, %v45
    %47 = vst [vmem:[#allocation2] sm:$0x1] %v46
    // Predicated region
    $region10: #{_fused_forward.1} parent=1 // pred_check
      _
    $region11: #{_fused_forward.1} parent=1 // pred_check_branch
      %49 = sbr.rel (0) target = $region13
    $region12: #{_fused_forward.1} parent=1 // pred_region
      %s51 = ssub.s32 16, 16
      %52 = vsyncadd [#allocation3], %s51
      %s54 = sshll.u32 [#allocation2], 4
      %s55 = int_to_ptr.vmem [resolvable:$true] %s54
      %57 = dma.vmem_to_hbm [thread:$0]  %s55, 16, %s2, [#allocation3]
    $region13: #{_fused_forward.1} parent=1 // pred_fallthru
      _
    // Predicated region
    $region14: #{_fused_forward.1} parent=1 // pred_check
      _
    $region15: #{_fused_forward.1} parent=1 // pred_check_branch
      %59 = sbr.rel (0) target = $region17
    $region16: #{_fused_forward.1} parent=1 // pred_region
      %60 = dma.done [#allocation3], 16
    $region17: #{_fused_forward.1} parent=1 // pred_fallthru
      _
    %61 = vsyncpa [#allocation3], 1

</llo_original>
